<compile_context>
chip_gen: v6e
topology: v6e:2x2x1
jax: 0.10.0
libtpu: 0.0.40
codegen_flags: <defaults>
</compile_context>

<pallas_src>
import jax
import jax.numpy as jnp
from jax import lax
from jax.experimental import pallas as pl
from jax.experimental.pallas import tpu as pltpu

# Small shapes consistent with the module (compressed_dim=11 is the module default).
TIMESTEPS = 8
N_FEATURES = 8
COMPRESSED_DIM = 11
HIDDEN_DIM = N_FEATURES * COMPRESSED_DIM  # 88 — required for the reshapes to be legal


def decoder_kernel(x_ref, wf_ref, b_ref, o_ref):
    # x_ref:  (1, COMPRESSED_DIM)           latent row
    # wf_ref: (N_FEATURES, COMPRESSED_DIM)  k-folded weight (untransposed; contract axis 1 of both)
    # b_ref:  (1, N_FEATURES)
    # o_ref:  (TIMESTEPS, N_FEATURES)
    row = lax.dot_general(
        x_ref[...],
        wf_ref[...],
        dimension_numbers=(((1,), (1,)), ((), ())),  # x @ W_folded.T without a transpose op
        preferred_element_type=jnp.float32,
    ) + b_ref[...]                                    # (1, N_FEATURES)
    # All timestep rows are identical -> single sublane-broadcast store.
    o_ref[...] = jnp.broadcast_to(row, (TIMESTEPS, N_FEATURES))


@jax.jit
def decoder_forward(x, w, b):
    """x: (1, COMPRESSED_DIM) f32; w: (N_FEATURES, HIDDEN_DIM); b: (N_FEATURES,)."""
    # Fold the torch repeat into the weight (one-time preprocessing):
    #   W_folded[f, c] = sum_k W[f, k*COMPRESSED_DIM + c]
    w_folded = w.reshape(N_FEATURES, N_FEATURES, COMPRESSED_DIM).sum(axis=1)
    b2 = b.reshape(1, N_FEATURES)

    return pl.pallas_call(
        decoder_kernel,
        out_shape=jax.ShapeDtypeStruct((TIMESTEPS, N_FEATURES), jnp.float32),
        # Gridless single-block kernel: whole operands live in VMEM, no grid
        # loop bookkeeping, no pipeline double-buffering.
        in_specs=[
            pl.BlockSpec(memory_space=pltpu.MemorySpace.VMEM),
            pl.BlockSpec(memory_space=pltpu.MemorySpace.VMEM),
            pl.BlockSpec(memory_space=pltpu.MemorySpace.VMEM),
        ],
        out_specs=pl.BlockSpec(memory_space=pltpu.MemorySpace.VMEM),
    )(x, w_folded, b2)


if __name__ == "__main__":
    key = jax.random.PRNGKey(0)
    kx, kw, kb = jax.random.split(key, 3)

    # Input latent vector (1, compressed_dim).
    x = jax.random.normal(kx, (1, COMPRESSED_DIM), dtype=jnp.float32)

    # Deterministic nn.Linear(HIDDEN_DIM, N_FEATURES) init (uniform +/- 1/sqrt(in)).
    bound = 1.0 / (HIDDEN_DIM ** 0.5)
    w = jax.random.uniform(kw, (N_FEATURES, HIDDEN_DIM), jnp.float32, -bound, bound)
    b = jax.random.uniform(kb, (N_FEATURES,), jnp.float32, -bound, bound)

    out = decoder_forward(x, w, b)
    out = jax.block_until_ready(out)

    # Reference check against plain JAX using the original (unfolded) torch math.
    x_rep_ref = jnp.tile(x, (TIMESTEPS, N_FEATURES))
    x_rep_ref = x_rep_ref.reshape(N_FEATURES, TIMESTEPS, COMPRESSED_DIM)
    x_rep_ref = x_rep_ref.reshape(TIMESTEPS, HIDDEN_DIM)
    ref = x_rep_ref @ w.T + b

    assert out.shape == (TIMESTEPS, N_FEATURES)
    assert jnp.allclose(out, ref, atol=1e-4, rtol=1e-4), "mismatch vs reference"

    print("KERNEL_OK")
</pallas_src>

<mosaic_0001>
module attributes {stable_mosaic.version = 11 : i64} {
  func.func @decoder_kernel(%arg0: memref<1x11xf32, #tpu.memory_space<vmem>>, %arg1: memref<8x11xf32, #tpu.memory_space<vmem>>, %arg2: memref<1x8xf32, #tpu.memory_space<vmem>>, %arg3: memref<8x8xf32, #tpu.memory_space<vmem>>) attributes {dimension_semantics = [], scalar_prefetch = 0 : i64, scratch_operands = 0 : i64, tpu.core_type = #tpu.core_type<tc>} {
    %c0 = arith.constant 0 : index
    %c0_0 = arith.constant 0 : index
    %0 = vector.load %arg0[%c0, %c0_0] : memref<1x11xf32, #tpu.memory_space<vmem>>, vector<1x11xf32>
    %c0_1 = arith.constant 0 : index
    %c0_2 = arith.constant 0 : index
    %1 = vector.load %arg1[%c0_1, %c0_2] : memref<8x11xf32, #tpu.memory_space<vmem>>, vector<8x11xf32>
    %cst = arith.constant dense<0.000000e+00> : vector<1x8xf32>
    %2 = tpu.matmul %0, %1, %cst {dimension_numbers = #tpu.dot_dimension_numbers<[1], [1], [0], [0], [0, 0, 1, 0], [], []>} : vector<1x11xf32>, vector<8x11xf32>, vector<1x8xf32> -> vector<1x8xf32>
    %c0_3 = arith.constant 0 : index
    %c0_4 = arith.constant 0 : index
    %3 = vector.load %arg2[%c0_3, %c0_4] : memref<1x8xf32, #tpu.memory_space<vmem>>, vector<1x8xf32>
    %4 = arith.addf %2, %3 : vector<1x8xf32>
    %5 = vector.shape_cast %4 : vector<1x8xf32> to vector<1x8xf32>
    %6 = vector.broadcast %5 : vector<1x8xf32> to vector<8x8xf32>
    %c0_5 = arith.constant 0 : index
    %c0_6 = arith.constant 0 : index
    %7 = vector.load %arg3[%c0_5, %c0_6] : memref<8x8xf32, #tpu.memory_space<vmem>>, vector<8x8xf32>
    tpu.vector_store %arg3[%c0_5, %c0_6], %6 {strides = array<i32>} : memref<8x8xf32, #tpu.memory_space<vmem>>, vector<8x8xf32>,
    return
  }
}

</mosaic_0001>

<llo_original>
// kernel: decoder_forward.1
$region0: #{decoder_forward.1}
  #allocation0 [shape = 'u32[]', space=smem, size = 0x4, offset = 0x4, fixed_abs, tag = 'smem constant byte address 0x4 - core index']
  #allocation1 [shape = 'u32[144,128]{1,0:T(1,128)}', space=vmem, size = 0x12000, scoped, tag = 'internal scratch']
  %s0 = inlined_call_operand.vmem [shape: f32[1,11], index: 0, kind: input, shape index: {}]
  %s1 = inlined_call_operand.vmem [shape: f32[8,11], index: 1, kind: input, shape index: {}]
  %s2 = inlined_call_operand.vmem [shape: f32[1,8], index: 2, kind: input, shape index: {}]
  %s3 = inlined_call_operand.hbm [shape: f32[8,8], index: 3, kind: output, shape index: {}]
  %s4 = sld [smem:[#allocation0]]
  $region22: #{decoder_forward.1} parent=0
    _
  %s6 = ssub.s32 1, %s4
  %s7 = scalar_select 0, %s6, %s4
  $region1: #{decoder_forward.1} parent=0
    #allocation2 [shape = 'u8[4096]{0}', space=vmem, size = 0x1000, scoped, tag = 'output window, operand 0, single buffered']
    #allocation3 [shape = 's32[1]{0}', space=sflag, size = 0x4, scoped, tag = 'scoped memory for decoder_forward.1']
    %8 = vsyncpa [#allocation3], 0
    // Predicated region
    $region2: #{decoder_forward.1} parent=1 // pred_check
      _
    $region3: #{decoder_forward.1} parent=1 // pred_check_branch
      %10 = sbr.rel (0) target = $region5
    $region4: #{decoder_forward.1} parent=1 // pred_region
      _
    $region5: #{decoder_forward.1} parent=1 // pred_fallthru
      _
    // Predicated region
    $region6: #{decoder_forward.1} parent=1 // pred_check
      _
    $region7: #{decoder_forward.1} parent=1 // pred_check_branch
      %12 = sbr.rel (0) target = $region9
    $region8: #{decoder_forward.1} parent=1 // pred_region
      _
    $region9: #{decoder_forward.1} parent=1 // pred_fallthru
      _
    // Predicated region
    $region10: #{decoder_forward.1} parent=1 // pred_check
      _
    $region11: #{decoder_forward.1} parent=1 // pred_check_branch
      %14 = sbr.rel (0) target = $region13
    $region12: #{decoder_forward.1} parent=1 // pred_region
      _
    $region13: #{decoder_forward.1} parent=1 // pred_fallthru
      _
    %v15 = vld [vmem:[%s0] sm:$0x1]
    %v16 = vld [vmem:[%s1] sm:$0xff]
    %v17 = vld [vmem:[%s2] sm:$0x1]
    %vm18 = vcmask 89088
    %v20 = vsel %vm18, %v15, 0
    %v23 = vsel %vm18, %v16, 0
    %25 = vmatprep.subr.mxu0 0.0
    %26 = vmatpush1.xpose.msra.mxu0 0.0
    %27 = vmatprep.subr.mxu0 0.0
    %28 = vmatpush1.xpose.msra.mxu0 0.0
    %29 = vmatprep.subr.mxu0 0.0
    %30 = vmatpush1.xpose.msra.mxu0 0.0
    %31 = vmatprep.subr.mxu0 0.0
    %32 = vmatpush1.xpose.msra.mxu0 0.0
    %33 = vmatprep.subr.mxu0 0.0
    %34 = vmatpush1.xpose.msra.mxu0 0.0
    %35 = vmatprep.subr.mxu0 0.0
    %36 = vmatpush1.xpose.msra.mxu0 0.0
    %37 = vmatprep.subr.mxu0 0.0
    %38 = vmatpush1.xpose.msra.mxu0 0.0
    %39 = vmatprep.subr.mxu0 0.0
    %40 = vmatpush1.xpose.msra.mxu0 0.0
    %41 = vmatprep.subr.mxu0 0.0
    %42 = vmatpush1.xpose.msra.mxu0 0.0
    %43 = vmatprep.subr.mxu0 0.0
    %44 = vmatpush1.xpose.msra.mxu0 0.0
    %45 = vmatprep.subr.mxu0 0.0
    %46 = vmatpush1.xpose.msra.mxu0 0.0
    %47 = vmatprep.subr.mxu0 0.0
    %48 = vmatpush1.xpose.msra.mxu0 0.0
    %49 = vmatprep.subr.mxu0 0.0
    %50 = vmatpush1.xpose.msra.mxu0 0.0
    %51 = vmatprep.subr.mxu0 0.0
    %52 = vmatpush1.xpose.msra.mxu0 0.0
    %53 = vmatprep.subr.mxu0 0.0
    %54 = vmatpush1.xpose.msra.mxu0 0.0
    %55 = vmatprep.subr.mxu0 0.0
    %56 = vmatpush1.xpose.msra.mxu0 %v23
    %57 = vmatprep.subr.mxu0 0.0
    %58 = vmatpush2.xpose.msra.mxu0 0.0
    %59 = vmatprep.subr.mxu0 0.0
    %60 = vmatpush2.xpose.msra.mxu0 0.0
    %61 = vmatprep.subr.mxu0 0.0
    %62 = vmatpush2.xpose.msra.mxu0 0.0
    %63 = vmatprep.subr.mxu0 0.0
    %64 = vmatpush2.xpose.msra.mxu0 0.0
    %65 = vmatprep.subr.mxu0 0.0
    %66 = vmatpush2.xpose.msra.mxu0 0.0
    %67 = vmatprep.subr.mxu0 0.0
    %68 = vmatpush2.xpose.msra.mxu0 0.0
    %69 = vmatprep.subr.mxu0 0.0
    %70 = vmatpush2.xpose.msra.mxu0 0.0
    %71 = vmatprep.subr.mxu0 0.0
    %72 = vmatpush2.xpose.msra.mxu0 0.0
    %73 = vmatprep.subr.mxu0 0.0
    %74 = vmatpush2.xpose.msra.mxu0 0.0
    %75 = vmatprep.subr.mxu0 0.0
    %76 = vmatpush2.xpose.msra.mxu0 0.0
    %77 = vmatprep.subr.mxu0 0.0
    %78 = vmatpush2.xpose.msra.mxu0 0.0
    %79 = vmatprep.subr.mxu0 0.0
    %80 = vmatpush2.xpose.msra.mxu0 0.0
    %81 = vmatprep.subr.mxu0 0.0
    %82 = vmatpush2.xpose.msra.mxu0 0.0
    %83 = vmatprep.subr.mxu0 0.0
    %84 = vmatpush2.xpose.msra.mxu0 0.0
    %85 = vmatprep.subr.mxu0 0.0
    %86 = vmatpush2.xpose.msra.mxu0 0.0
    %87 = vmatprep.subr.mxu0 0.0
    %88 = vmatpush2.xpose.msra.mxu0 0.0
    %89 = vmatprep.mubr.f32.mxu0 0.0
    %90 = vmatmul.mubr.f32.gmra.mxu0 %v20
    %v91 = vpop.f32.mrf.mxu0
    %v92 = vadd.f32 %v17, %v91
    %v93 = vpop.f32.mrf.mxu0
    %94 = vdwg.mxu0
    %v95 = vlaneseq
    %v96 = vshrl.u32 %v95, 7
    %v97 = vsub.s32 0, %v96
    %v98 = vrot.slane %v92, %v97
    %vm99 = vcmask 64512
    %100 = vst.msk [vmem:[#allocation2] sm:$0xff] %vm99, %v98
    // Predicated region
    $region14: #{decoder_forward.1} parent=1 // pred_check
      _
    $region15: #{decoder_forward.1} parent=1 // pred_check_branch
      %102 = sbr.rel (0) target = $region17
    $region16: #{decoder_forward.1} parent=1 // pred_region
      %s104 = ssub.s32 128, 128
      %105 = vsyncadd [#allocation3], %s104
      %s107 = sshll.u32 [#allocation2], 4
      %s108 = int_to_ptr.vmem [resolvable:$true] %s107
      %110 = dma.vmem_to_hbm [thread:$0]  %s108, 128, %s3, [#allocation3]
    $region17: #{decoder_forward.1} parent=1 // pred_fallthru
      _
    // Predicated region
    $region18: #{decoder_forward.1} parent=1 // pred_check
      _
    $region19: #{decoder_forward.1} parent=1 // pred_check_branch
      %112 = sbr.rel (0) target = $region21
    $region20: #{decoder_forward.1} parent=1 // pred_region
      %113 = dma.done [#allocation3], 128
    $region21: #{decoder_forward.1} parent=1 // pred_fallthru
      _
    %114 = vsyncpa [#allocation3], 1

</llo_original>
